<compile_context>
chip_gen: v7x
topology: tpu7x:2x2x1
jax: 0.10.0
libtpu: 0.0.40
codegen_flags: <defaults>
</compile_context>

<pallas_src>
import functools

import jax
import jax.numpy as jnp
from jax import lax
from jax.experimental import pallas as pl
from jax.experimental.pallas import tpu as pltpu


def _round_up(a, b):
    return ((a + b - 1) // b) * b


def _default_num_cores():
    """Best-effort TensorCore count; falls back to 1 (always correct)."""
    try:
        info = pltpu.get_tpu_info()
        for name in ("tensorcores_per_chip", "num_tensorcores", "num_cores"):
            v = getattr(info, name, None)
            if v is not None and int(v) >= 1:
                return int(v)
    except Exception:
        pass
    try:
        v = getattr(jax.devices()[0], "num_cores", None)
        if v is not None and int(v) >= 1:
            return int(v)
    except Exception:
        pass
    return 1


def _l2mae_kernel(x_ref, y_ref, o_ref, acc_ref, *,
                  reduction, total_n, tile_c, blocks_per_core, valid_blocks):
    c = pl.program_id(0)          # core axis ("parallel")
    i = pl.program_id(1)          # column-block reduction axis ("arbitrary")

    # Per-core init of the resident vector accumulator on the first step.
    @pl.when(i == 0)
    def _():
        acc_ref[...] = jnp.zeros_like(acc_ref)

    # Linear step and validity mask: handles the ragged column tail (no
    # wrapper-side zero padding) and any clamped duplicate block on the
    # multi-core axis.  Masking zeroes the diff BEFORE square/sqrt/accumulate.
    s = c * blocks_per_core + i
    block_idx = jnp.minimum(s, valid_blocks - 1)
    col = block_idx * tile_c + lax.broadcasted_iota(jnp.int32, (1, tile_c), 1)
    mask = jnp.logical_and(col < total_n, s < valid_blocks)

    # Hot path: lane-dense (D, tile_c) blocks, f32 accumulation (mandatory on
    # v5e, cheap everywhere since the kernel is memory-bound).
    diff = x_ref[...].astype(jnp.float32) - y_ref[...].astype(jnp.float32)
    diff = jnp.where(mask, diff, 0.0)                  # (1,tc) mask broadcasts
    sq = jnp.sum(diff * diff, axis=0, keepdims=True)   # (1, tile_c)
    acc_ref[...] += jnp.sqrt(sq)                       # per-column L2 norms

    # Epilogue: one cross-lane reduce + optional 1/N scale, once per core.
    @pl.when(i == pl.num_programs(1) - 1)
    def _():
        total = jnp.sum(acc_ref[...])
        if reduction == "mean":
            total = total * (1.0 / float(total_n))
        o_ref[...] = jnp.broadcast_to(total, o_ref.shape).astype(o_ref.dtype)


@functools.partial(jax.jit,
                   static_argnames=("reduction", "max_tile_c", "num_cores"))
def _l2mae_loss_impl(x, y, reduction, max_tile_c, num_cores):
    d = x.shape[-1]
    n = 1
    for s in x.shape[:-1]:
        n *= s
    x2 = x.reshape(n, d)
    y2 = y.reshape(n, d)

    # One-time layout plumbing: lane-dense (D, N) so the long axis sits on
    # the 128-wide lane dimension.  No padding copy: tail handled in-kernel.
    xt = jnp.transpose(x2)
    yt = jnp.transpose(y2)

    # ---- tile sizing -----------------------------------------------------
    # VMEM per column ~ 4B * (2 inputs * 2 buffers * round_up(D,8) + 8 (acc)).
    d_pad = _round_up(max(d, 1), 8)
    bytes_per_col = 4 * (4 * d_pad + 8)
    vmem_budget = 12 * 1024 * 1024        # safely under every gen's default
    tile_cap = max(128, (vmem_budget // bytes_per_col) // 128 * 128)
    tile_cap = min(tile_cap, max_tile_c)

    if n < 128 * num_cores:               # not enough work to split cores
        num_cores = 1
    cols_per_core = pl.cdiv(n, num_cores)
    # >= 4 blocks/core when there is enough work, so compute overlaps DMA;
    # then re-derive tile_c so per-block padding waste is <= 127 columns.
    blocks_per_core = max(pl.cdiv(cols_per_core, tile_cap),
                          min(4, pl.cdiv(cols_per_core, 512)),
                          1)
    tile_c = _round_up(pl.cdiv(cols_per_core, blocks_per_core), 128)
    blocks_per_core = pl.cdiv(cols_per_core, tile_c)
    valid_blocks = pl.cdiv(n, tile_c)     # blocks that hold any real columns

    kernel = functools.partial(
        _l2mae_kernel, reduction=reduction, total_n=n, tile_c=tile_c,
        blocks_per_core=blocks_per_core, valid_blocks=valid_blocks)

    # Clamp so no DMA is issued fully out of range; duplicates are masked
    # out inside the kernel via `s < valid_blocks`.
    col_map = lambda c, i: (0, jnp.minimum(c * blocks_per_core + i,
                                           valid_blocks - 1))

    out = pl.pallas_call(
        kernel,
        out_shape=jax.ShapeDtypeStruct((1, num_cores * 128), jnp.float32),
        grid_spec=pltpu.PrefetchScalarGridSpec(
            num_scalar_prefetch=0,
            grid=(num_cores, blocks_per_core),
            in_specs=[
                pl.BlockSpec((d, tile_c), col_map),
                pl.BlockSpec((d, tile_c), col_map),
            ],
            out_specs=pl.BlockSpec((1, 128), lambda c, i: (0, c)),
            scratch_shapes=[pltpu.VMEM((1, tile_c), jnp.float32)],
        ),
        compiler_params=pltpu.CompilerParams(
            dimension_semantics=("parallel", "arbitrary"),
        ),
    )(xt, yt)

    # Each core broadcast its (already 1/N-scaled for 'mean') partial across
    # its 128-lane block; take lane 0 of each block and sum the partials.
    partials = out.reshape(num_cores, 128)[:, 0]
    return jnp.sum(partials)


def l2mae_loss(x, y, reduction="mean", *, max_tile_c=65536, num_cores=None):
    assert reduction in ("mean", "sum")
    assert x.shape == y.shape and x.ndim >= 2
    if num_cores is None:
        num_cores = _default_num_cores()
    return _l2mae_loss_impl(x, y, reduction=reduction,
                            max_tile_c=int(max_tile_c),
                            num_cores=int(num_cores))


if __name__ == "__main__":
    key = jax.random.PRNGKey(0)
    k1, k2, k3, k4, k5, k6 = jax.random.split(key, 6)

    # Small force-like tensors: 64 atoms, 3 spatial components.
    N, D = 64, 3
    x = jax.random.normal(k1, (N, D), dtype=jnp.float32)
    y = jax.random.normal(k2, (N, D), dtype=jnp.float32)

    loss_mean = jax.block_until_ready(l2mae_loss(x, y, reduction="mean"))
    loss_sum = jax.block_until_ready(l2mae_loss(x, y, reduction="sum"))

    ref_dists = jnp.linalg.norm(x - y, axis=-1)
    ref_mean = jnp.mean(ref_dists)
    ref_sum = jnp.sum(ref_dists)
    assert jnp.allclose(loss_mean, ref_mean, rtol=1e-5, atol=1e-5), (loss_mean, ref_mean)
    assert jnp.allclose(loss_sum, ref_sum, rtol=1e-5, atol=1e-4), (loss_sum, ref_sum)

    # Non-multiple-of-128 N exercises the in-kernel tail masking (no pad).
    N2 = 300
    x2 = jax.random.normal(k3, (N2, D), dtype=jnp.float32)
    y2 = jax.random.normal(k4, (N2, D), dtype=jnp.float32)
    loss2 = jax.block_until_ready(l2mae_loss(x2, y2, reduction="mean"))
    ref2 = jnp.mean(jnp.linalg.norm(x2 - y2, axis=-1))
    assert jnp.allclose(loss2, ref2, rtol=1e-5, atol=1e-5), (loss2, ref2)

    # Higher-rank input: leading dims are flattened (mean/sum over them).
    x3 = jax.random.normal(k5, (2, 50, 3), dtype=jnp.float32)
    y3 = jax.random.normal(k6, (2, 50, 3), dtype=jnp.float32)
    loss3 = jax.block_until_ready(l2mae_loss(x3, y3, reduction="sum"))
    ref3 = jnp.sum(jnp.linalg.norm(x3 - y3, axis=-1))
    assert jnp.allclose(loss3, ref3, rtol=1e-5, atol=1e-4), (loss3, ref3)

    print("KERNEL_OK")
</pallas_src>

<mosaic_0001>
module attributes {stable_mosaic.version = 11 : i64} {
  func.func @_l2mae_kernel(%arg0: i32, %arg1: i32, %arg2: memref<3x128xf32, #tpu.memory_space<vmem>>, %arg3: memref<3x128xf32, #tpu.memory_space<vmem>>, %arg4: memref<1x128xf32, #tpu.memory_space<vmem>>, %arg5: memref<1x128xf32, #tpu.memory_space<vmem>>) attributes {dimension_semantics = [#tpu.dimension_semantics<parallel>, #tpu.dimension_semantics<arbitrary>], iteration_bounds = array<i64: 1, 1>, scalar_prefetch = 0 : i64, scratch_operands = 1 : i64, tpu.core_type = #tpu.core_type<tc>, window_params = [{transform_indices = @transform_0, window_bounds = array<i64: 3, 128>}, {transform_indices = @transform_1, window_bounds = array<i64: 3, 128>}, {transform_indices = @transform_2, window_bounds = array<i64: 1, 128>}]} {
    %c0_i32 = arith.constant 0 : i32
    %0 = arith.cmpi eq, %arg1, %c0_i32 : i32
    %1 = arith.extui %0 : i1 to i32
    %c0_i32_0 = arith.constant 0 : i32
    %2 = arith.cmpi ne, %1, %c0_i32_0 : i32
    scf.if %2 {
      %cst_13 = arith.constant 0.000000e+00 : f32
      %32 = vector.broadcast %cst_13 : f32 to vector<1x128xf32>
      %c0_14 = arith.constant 0 : index
      %c0_15 = arith.constant 0 : index
      %33 = vector.load %arg5[%c0_14, %c0_15] : memref<1x128xf32, #tpu.memory_space<vmem>>, vector<1x128xf32>
      tpu.vector_store %arg5[%c0_14, %c0_15], %32 {strides = array<i32>} : memref<1x128xf32, #tpu.memory_space<vmem>>, vector<1x128xf32>,
    } else {
    }
    %c1_i32 = arith.constant 1 : i32
    %3 = arith.muli %arg0, %c1_i32 : i32
    %4 = arith.addi %3, %arg1 : i32
    %c0_i32_1 = arith.constant 0 : i32
    %5 = arith.minsi %4, %c0_i32_1 : i32
    %c128_i32 = arith.constant 128 : i32
    %6 = arith.muli %5, %c128_i32 : i32
    %7 = tpu.iota {dimensions = array<i32: 1>} : vector<1x128xi32>
    %8 = vector.broadcast %6 : i32 to vector<1x128xi32>
    %9 = arith.addi %8, %7 : vector<1x128xi32>
    %c64_i32 = arith.constant 64 : i32
    %10 = vector.broadcast %c64_i32 : i32 to vector<1x128xi32>
    %11 = arith.cmpi slt, %9, %10 : vector<1x128xi32>
    %c1_i32_2 = arith.constant 1 : i32
    %12 = arith.cmpi slt, %4, %c1_i32_2 : i32
    %13 = vector.broadcast %12 : i1 to vector<1x128xi1>
    %14 = arith.andi %11, %13 : vector<1x128xi1>
    %c0 = arith.constant 0 : index
    %c0_3 = arith.constant 0 : index
    %15 = vector.load %arg2[%c0, %c0_3] : memref<3x128xf32, #tpu.memory_space<vmem>>, vector<3x128xf32>
    %c0_4 = arith.constant 0 : index
    %c0_5 = arith.constant 0 : index
    %16 = vector.load %arg3[%c0_4, %c0_5] : memref<3x128xf32, #tpu.memory_space<vmem>>, vector<3x128xf32>
    %17 = arith.subf %15, %16 : vector<3x128xf32>
    %cst = arith.constant 0.000000e+00 : f32
    %18 = vector.shape_cast %14 : vector<1x128xi1> to vector<1x128xi1>
    %19 = vector.broadcast %18 : vector<1x128xi1> to vector<3x128xi1>
    %20 = vector.broadcast %cst : f32 to vector<3x128xf32>
    %21 = arith.select %19, %17, %20 : vector<3x128xi1>, vector<3x128xf32>
    %22 = arith.mulf %21, %21 : vector<3x128xf32>
    %cst_6 = arith.constant dense<0.000000e+00> : vector<128xf32>
    %23 = vector.multi_reduction <add>, %22, %cst_6 [0] : vector<3x128xf32> to vector<128xf32>
    %24 = vector.shape_cast %23 : vector<128xf32> to vector<1x128xf32>
    %c0_7 = arith.constant 0 : index
    %c0_8 = arith.constant 0 : index
    %25 = vector.load %arg5[%c0_7, %c0_8] : memref<1x128xf32, #tpu.memory_space<vmem>>, vector<1x128xf32>
    %26 = math.sqrt %24 : vector<1x128xf32>
    %27 = arith.addf %25, %26 : vector<1x128xf32>
    %c0_9 = arith.constant 0 : index
    %c0_10 = arith.constant 0 : index
    %28 = vector.load %arg5[%c0_9, %c0_10] : memref<1x128xf32, #tpu.memory_space<vmem>>, vector<1x128xf32>
    tpu.vector_store %arg5[%c0_9, %c0_10], %27 {strides = array<i32>} : memref<1x128xf32, #tpu.memory_space<vmem>>, vector<1x128xf32>,
    %c0_i32_11 = arith.constant 0 : i32
    %29 = arith.cmpi eq, %arg1, %c0_i32_11 : i32
    %30 = arith.extui %29 : i1 to i32
    %c0_i32_12 = arith.constant 0 : i32
    %31 = arith.cmpi ne, %30, %c0_i32_12 : i32
    scf.if %31 {
      %c0_13 = arith.constant 0 : index
      %c0_14 = arith.constant 0 : index
      %32 = vector.load %arg5[%c0_13, %c0_14] : memref<1x128xf32, #tpu.memory_space<vmem>>, vector<1x128xf32>
      %33 = vector.shape_cast %32 : vector<1x128xf32> to vector<1x1x128xf32>
      %cst_15 = arith.constant dense<0.000000e+00> : vector<1xf32>
      %34 = vector.multi_reduction <add>, %33, %cst_15 [1, 2] : vector<1x1x128xf32> to vector<1xf32>
      %35 = vector.shape_cast %34 : vector<1xf32> to vector<1x1x1xf32>
      %36 = vector.extract %35[0, 0, 0] : f32 from vector<1x1x1xf32>
      %cst_16 = arith.constant 1.562500e-02 : f32
      %37 = arith.mulf %36, %cst_16 : f32
      %38 = vector.broadcast %37 : f32 to vector<1x128xf32>
      %c0_17 = arith.constant 0 : index
      %c0_18 = arith.constant 0 : index
      %39 = vector.load %arg4[%c0_17, %c0_18] : memref<1x128xf32, #tpu.memory_space<vmem>>, vector<1x128xf32>
      tpu.vector_store %arg4[%c0_17, %c0_18], %38 {strides = array<i32>} : memref<1x128xf32, #tpu.memory_space<vmem>>, vector<1x128xf32>,
    } else {
    }
    return
  }
  func.func @transform_0(%arg0: i32, %arg1: i32) -> (i32, i32) {
    %c1_i32 = arith.constant 1 : i32
    %0 = arith.muli %arg0, %c1_i32 : i32
    %1 = arith.addi %0, %arg1 : i32
    %c0_i32 = arith.constant 0 : i32
    %2 = arith.minsi %1, %c0_i32 : i32
    %c0_i32_0 = arith.constant 0 : i32
    %c0_i32_1 = arith.constant 0 : i32
    return %c0_i32_0, %2 : i32, i32
  }
  func.func @transform_1(%arg0: i32, %arg1: i32) -> (i32, i32) {
    %c1_i32 = arith.constant 1 : i32
    %0 = arith.muli %arg0, %c1_i32 : i32
    %1 = arith.addi %0, %arg1 : i32
    %c0_i32 = arith.constant 0 : i32
    %2 = arith.minsi %1, %c0_i32 : i32
    %c0_i32_0 = arith.constant 0 : i32
    %c0_i32_1 = arith.constant 0 : i32
    return %c0_i32_0, %2 : i32, i32
  }
  func.func @transform_2(%arg0: i32, %arg1: i32) -> (i32, i32) {
    %c0_i32 = arith.constant 0 : i32
    %c0_i32_0 = arith.constant 0 : i32
    return %c0_i32, %arg0 : i32, i32
  }
}

</mosaic_0001>

<llo_original>
// kernel: _l2mae_loss_impl.1
$region0: #{_l2mae_loss_impl.1}
  #allocation0 [shape = 'u32[]', space=smem, size = 0x4, offset = 0x4, fixed_abs, tag = 'smem constant byte address 0x4 - core index']
  #allocation1 [shape = 'u32[144,128]{1,0:T(1,128)}', space=vmem, size = 0x12000, scoped, tag = 'internal scratch']
  #allocation2 [shape = 'f32[1,128]{1,0:T(1,128)}', space=vmem, size = 0x200, scoped, tag = 'scratch operand']
  %s0 = inlined_call_operand.vmem [shape: f32[3,64], index: 0, kind: input, shape index: {}]
  %s1 = inlined_call_operand.vmem [shape: f32[3,64], index: 1, kind: input, shape index: {}]
  %s2 = inlined_call_operand.hbm [shape: f32[1,128], index: 2, kind: output, shape index: {}]
  %s3 = sld [smem:[#allocation0]]
  $region26: #{_l2mae_loss_impl.1} parent=0
    _
  %s5 = ssub.s32 1, %s3
  %s6 = scalar_select 0, %s5, %s3
  $region1: #{_l2mae_loss_impl.1} parent=0
    #allocation3 [shape = 'u8[512]{0}', space=vmem, size = 0x400, scoped, tag = 'output window, operand 0, single buffered']
    #allocation4 [shape = 's32[1]{0}', space=sflag, size = 0x4, scoped, tag = 'scoped memory for _l2mae_loss_impl.1']
    %7 = vsyncpa [#allocation4], 0
    // Predicated region
    $region2: #{_l2mae_loss_impl.1} parent=1 // pred_check
      _
    $region3: #{_l2mae_loss_impl.1} parent=1 // pred_check_branch
      %9 = sbr.rel (0) target = $region5
    $region4: #{_l2mae_loss_impl.1} parent=1 // pred_region
      %s10 = sadd.s32 0, 0
      %p11 = scmp.lt.s32.totalorder %s10, 0
      %s12 = scalar_select %p11, %s10, 0
      %p13 = scmp.lt.s32.totalorder %s12, 0
      %s14 = scalar_select %p13, %s12, 0
      %s15 = smul.addr %s14, 4
      %s16 = scalar_lea.vmem %s0, %s15
      %s17 = sadd.s32 0, 0
      %p18 = scmp.lt.s32.totalorder %s17, 0
      %s19 = scalar_select %p18, %s17, 0
    $region5: #{_l2mae_loss_impl.1} parent=1 // pred_fallthru
      _
    // Predicated region
    $region6: #{_l2mae_loss_impl.1} parent=1 // pred_check
      _
    $region7: #{_l2mae_loss_impl.1} parent=1 // pred_check_branch
      %21 = sbr.rel (0) target = $region9
    $region8: #{_l2mae_loss_impl.1} parent=1 // pred_region
      %s22 = sadd.s32 0, 0
      %p23 = scmp.lt.s32.totalorder %s22, 0
      %s24 = scalar_select %p23, %s22, 0
      %p25 = scmp.lt.s32.totalorder %s24, 0
      %s26 = scalar_select %p25, %s24, 0
      %s27 = smul.addr %s26, 4
      %s28 = scalar_lea.vmem %s1, %s27
      %s29 = sadd.s32 0, 0
      %p30 = scmp.lt.s32.totalorder %s29, 0
      %s31 = scalar_select %p30, %s29, 0
    $region9: #{_l2mae_loss_impl.1} parent=1 // pred_fallthru
      _
    %s32 = sadd.s32 0, 0
    %p33 = scmp.lt.s32.totalorder %s32, 0
    %s34 = scalar_select %p33, %s32, 0
    %p35 = scmp.lt.s32.totalorder %s34, 0
    %s36 = scalar_select %p35, %s34, 0
    %s37 = smul.addr %s36, 4
    %s38 = scalar_lea.vmem %s0, %s37
    %s39 = sadd.s32 0, 0
    %p40 = scmp.lt.s32.totalorder %s39, 0
    %s41 = scalar_select %p40, %s39, 0
    %p42 = scmp.lt.s32.totalorder %s41, 0
    %s43 = scalar_select %p42, %s41, 0
    %s44 = smul.addr %s43, 4
    %s45 = scalar_lea.vmem %s1, %s44
    %s46 = sadd.s32 0, 0
    %p47 = scmp.lt.s32.totalorder %s46, 0
    %s48 = scalar_select %p47, %s46, 0
    %p49 = scmp.lt.s32.totalorder %s48, 0
    %s50 = scalar_select %p49, %s48, 0
    %s51 = smul.addr %s50, 4
    %s52 = scalar_lea.vmem %s0, %s51
    %s53 = sadd.s32 0, 0
    %p54 = scmp.lt.s32.totalorder %s53, 0
    %s55 = scalar_select %p54, %s53, 0
    %s56 = sadd.s32 0, 0
    %p57 = scmp.lt.s32.totalorder %s56, 0
    %s58 = scalar_select %p57, %s56, 0
    %p59 = scmp.lt.s32.totalorder %s58, 0
    %s60 = scalar_select %p59, %s58, 0
    %s61 = smul.addr %s60, 4
    %s62 = scalar_lea.vmem %s1, %s61
    %s63 = sadd.s32 0, 0
    %p64 = scmp.lt.s32.totalorder %s63, 0
    %s65 = scalar_select %p64, %s63, 0
    %p66 = scmp.eq.s32.totalorder 0, 0
    // Predicated region
    $region10: #{_l2mae_loss_impl.1} parent=1 // pred_check
      %p67 = pneg %p66
    $region11: #{_l2mae_loss_impl.1} parent=1 // pred_check_branch
      %69 = sbr.rel (%p67) target = $region13
    $region12: #{_l2mae_loss_impl.1} parent=1 // pred_region
      %70 = vst [vmem:[#allocation2] sm:$0x1] 0.0
    $region13: #{_l2mae_loss_impl.1} parent=1 // pred_fallthru
      _
    %s71 = sadd.s32 0, 0
    %p72 = scmp.lt.s32.totalorder %s71, 0
    %s73 = scalar_select %p72, %s71, 0
    %s74 = smul.u32 %s73, 128
    %v75 = vlaneseq
    %v76 = vand.u32 %v75, 127
    %v77 = vstv %s74
    %v78 = vadd.s32 %v77, %v76
    %vm79 = vcmp.lt.s32.totalorder %v78, 64
    %p80 = scmp.lt.s32.totalorder %s71, 1
    %s81 = scalar_select %p80, 1, 0
    %v82 = vstv %s81
    %vm83 = vcmp.eq.s32.totalorder %v82, 1
    %vm84 = vmand %vm79, %vm83
    %v85 = vld [vmem:[%s52] sm:$0x7]
    %v86 = vld [vmem:[%s62] sm:$0x7]
    %v87 = vsub.f32 %v85, %v86
    %v88 = vsel %vm84, 1, 0
    %vm89 = vcmp.eq.s32.totalorder %v88, 1
    %v90 = vsel %vm89, %v87, 0.0
    %v91 = vmul.f32 %v90, %v90
    %vm92 = vcmask 1042432
    %v93 = vsel %vm92, %v91, 0.0
    %v94 = vrot.slane %v93, 4
    %v95 = vadd.f32 %v93, %v94
    %v96 = vrot.slane %v95, 2
    %v97 = vadd.f32 %v95, %v96
    %v98 = vrot.slane %v97, 1
    %v99 = vadd.f32 %v97, %v98
    %v100 = vld [vmem:[#allocation2] sm:$0x1]
    %v101 = vrsqrt.pop %v99
    %v102 = vmul.f32 %v99, %v101
    %vm103 = vcmp.eq.f32.partialorder %v99, inf
    %v104 = vsel %vm103, %v99, %v102
    %vm105 = vcmp.eq.f32.partialorder %v99, 0.0
    %v106 = vand.u32 %v99, 2147483648
    %v107 = vsel %vm105, %v106, %v104
    %v108 = vadd.f32 %v100, %v107
    %109 = vst [vmem:[#allocation2] sm:$0x1] %v108
    // Predicated region
    $region14: #{_l2mae_loss_impl.1} parent=1 // pred_check
      %p110 = pneg %p66
    $region15: #{_l2mae_loss_impl.1} parent=1 // pred_check_branch
      %112 = sbr.rel (%p110) target = $region17
    $region16: #{_l2mae_loss_impl.1} parent=1 // pred_region
      %v113 = vld [vmem:[#allocation2] sm:$0x1]
      %vm114 = vcmask 1040384
      %v115 = vsel %vm114, %v113, 0.0
      %116 = vadd.xlane.f32.xlu0 %v115
      %v117 = vpop.xlane.xlu0 %116
      %v118 = vrot.slane %v117, 4
      %v119 = vadd.f32 %v117, %v118
      %v120 = vrot.slane %v119, 2
      %v121 = vadd.f32 %v119, %v120
      %v122 = vrot.slane %v121, 1
      %v123 = vadd.f32 %v121, %v122
      %s124 = vtos %v123
      %s125 = smul.f32 %s124, 0.015625
      %v126 = vstv %s125
      %127 = vst [vmem:[#allocation3] sm:$0x1] %v126
    $region17: #{_l2mae_loss_impl.1} parent=1 // pred_fallthru
      _
    // Predicated region
    $region18: #{_l2mae_loss_impl.1} parent=1 // pred_check
      _
    $region19: #{_l2mae_loss_impl.1} parent=1 // pred_check_branch
      %129 = sbr.rel (0) target = $region21
    $region20: #{_l2mae_loss_impl.1} parent=1 // pred_region
      %s131 = ssub.s32 16, 16
      %132 = vsyncadd [#allocation4], %s131
      %s134 = sshll.u32 [#allocation3], 4
      %s135 = int_to_ptr.vmem [resolvable:$true] %s134
      %137 = dma.vmem_to_hbm [thread:$0]  %s135, 16, %s2, [#allocation4]
    $region21: #{_l2mae_loss_impl.1} parent=1 // pred_fallthru
      _
    // Predicated region
    $region22: #{_l2mae_loss_impl.1} parent=1 // pred_check
      _
    $region23: #{_l2mae_loss_impl.1} parent=1 // pred_check_branch
      %139 = sbr.rel (0) target = $region25
    $region24: #{_l2mae_loss_impl.1} parent=1 // pred_region
      %140 = dma.done [#allocation4], 16
    $region25: #{_l2mae_loss_impl.1} parent=1 // pred_fallthru
      _
    %141 = vsyncpa [#allocation4], 1

</llo_original>
